<compile_context>
chip_gen: v5e
topology: v5e:2x2
jax: 0.10.0
libtpu: 0.0.40
codegen_flags: <defaults>
</compile_context>

<pallas_src>
import functools

import jax
import jax.numpy as jnp
from jax.experimental import pallas as pl
from jax.experimental.pallas import tpu as pltpu


def _vmem_budget_bytes():
    """~80% of physical VMEM, with a conservative fallback."""
    try:
        info = pltpu.get_tpu_info()
        cap = getattr(info, "vmem_capacity_bytes", None)
        if cap:
            return int(cap * 0.8)
    except Exception:
        pass
    return 32 * 1024 * 1024


def _pick_lane_tile(hw_pad, c, itemsize, budget):
    """Largest lane tile (multiple of 128, divides hw_pad) whose 4 buffers fit."""
    n128 = hw_pad // 128
    for k in range(n128, 0, -1):
        if n128 % k:
            continue
        tile = 128 * k
        if 4 * c * tile * itemsize <= budget:
            return tile
    return 128


# ---------------------------------------------------------------------------
# Whole-slab kernel: one grid step per batch element, whole (C, HW_pad) slab in
# VMEM -> exactly one HBM read + one HBM write of x (memory-bound optimum).
# ---------------------------------------------------------------------------
def _whole_slab_kernel(x_ref, w1t_ref, w2_ref, out_ref, *, inv_hw):
    # x_ref  : (C, HW_pad)  one batch element; channels on sublanes, pixels on lanes
    # w1t_ref: (C, Ch) = W1.T   (first Linear, no bias), Ch = C // ratio
    # w2_ref : (C, Ch) = W2     (second Linear, no bias)
    # out_ref: (C, HW_pad), same dtype as x (native I/O dtype)
    x = x_ref[...]
    xf = x.astype(jnp.float32)

    # Adaptive avg pool over spatial. Padded lanes are zero, so the sum is the
    # true sum; divide by the *true* HW (inv_hw baked in, not the padded width).
    m = jnp.sum(xf, axis=1, keepdims=True) * inv_hw              # (C, 1)

    # Tiny squeeze-excite MLP on VPU/XLU (kept off the MXU):
    # h = relu(W1 @ m) as broadcast-multiply + sublane reduce    -> (1, Ch)
    h = jnp.maximum(jnp.sum(w1t_ref[...] * m, axis=0, keepdims=True), 0.0)
    # a = W2 @ h as broadcast-multiply + lane reduce              -> (C, 1)
    a = jnp.sum(w2_ref[...] * h, axis=1, keepdims=True)

    scale = jax.nn.sigmoid(a)                                    # (C, 1), f32
    out_ref[...] = (xf * scale).astype(out_ref.dtype)


# ---------------------------------------------------------------------------
# Two-pass fallback (slab exceeds VMEM budget): pass 1 accumulates per-channel
# sums tiled over HW; the (B, C) MLP + sigmoid runs in plain JAX; pass 2
# applies the precomputed per-channel gate tiled over HW.
# ---------------------------------------------------------------------------
def _channel_sum_kernel(x_ref, sums_ref):
    @pl.when(pl.program_id(1) == 0)
    def _():
        sums_ref[...] = jnp.zeros_like(sums_ref)
    sums_ref[...] += jnp.sum(x_ref[...].astype(jnp.float32), axis=1, keepdims=True)


def _apply_scale_kernel(x_ref, scale_ref, out_ref):
    out_ref[...] = (x_ref[...].astype(jnp.float32) * scale_ref[...]).astype(out_ref.dtype)


def _channel_attention_two_pass(x_flat, w1t, w2f, inv_hw, budget, itemsize):
    B, C, HW_pad = x_flat.shape
    tile = _pick_lane_tile(HW_pad, C, itemsize, budget)
    n_tiles = HW_pad // tile

    # Pass 1: per-channel sums; (C, 1) f32 output block is resident across the
    # HW axis (same block index) -> init/accumulate via pl.when.
    sums = pl.pallas_call(
        _channel_sum_kernel,
        out_shape=jax.ShapeDtypeStruct((B, C, 1), jnp.float32),
        grid=(B, n_tiles),
        in_specs=[pl.BlockSpec((None, C, tile), lambda b, t: (b, 0, t))],
        out_specs=pl.BlockSpec((None, C, 1), lambda b, t: (b, 0, 0)),
        compiler_params=pltpu.CompilerParams(
            dimension_semantics=("parallel", "arbitrary"),
            vmem_limit_bytes=int(budget),
        ),
        cost_estimate=pl.CostEstimate(
            flops=int(B * C * HW_pad),
            transcendentals=0,
            bytes_accessed=int(B * C * HW_pad * itemsize + B * C * 4),
        ),
    )(x_flat)

    # Tiny (B, C) squeeze-excite MLP + sigmoid in plain JAX (negligible cost).
    avg = sums[:, :, 0] * inv_hw                                  # (B, C)
    h = jnp.maximum(avg @ w1t, 0.0)                               # (B, Ch)
    a = h @ w2f.T                                                 # (B, C)
    scale = jax.nn.sigmoid(a).astype(jnp.float32)[:, :, None]     # (B, C, 1)

    # Pass 2: apply the per-channel gate, tiled over HW. Both axes "parallel"
    # so v7x's second TensorCore gets work regardless of batch size.
    return pl.pallas_call(
        _apply_scale_kernel,
        out_shape=jax.ShapeDtypeStruct((B, C, HW_pad), x_flat.dtype),
        grid=(B, n_tiles),
        in_specs=[
            pl.BlockSpec((None, C, tile), lambda b, t: (b, 0, t)),
            pl.BlockSpec((None, C, 1), lambda b, t: (b, 0, 0)),
        ],
        out_specs=pl.BlockSpec((None, C, tile), lambda b, t: (b, 0, t)),
        compiler_params=pltpu.CompilerParams(
            dimension_semantics=("parallel", "parallel"),
            vmem_limit_bytes=int(budget),
        ),
        cost_estimate=pl.CostEstimate(
            flops=int(B * C * HW_pad),
            transcendentals=0,
            bytes_accessed=int(2 * B * C * HW_pad * itemsize),
        ),
    )(x_flat, scale)


def channel_attention(x, w1, w2, *, force_two_pass=False):
    """ChannelAttention forward.

    x : (B, C, H, W) float array (I/O stays in this dtype)
    w1: (C // ratio, C)  -- fc[0].weight
    w2: (C, C // ratio)  -- fc[2].weight
    """
    B, C, H, W = x.shape
    HW = H * W
    Ch = w1.shape[0]
    x_dtype = x.dtype
    itemsize = jnp.dtype(x_dtype).itemsize

    # Lane-align the spatial axis (zero padding keeps the channel sums exact).
    HW_pad = ((HW + 127) // 128) * 128
    x_flat = x.reshape(B, C, HW)
    if HW_pad != HW:
        # TODO(synk): this pad is one extra HBM copy; fold into the producer if hot.
        x_flat = jnp.pad(x_flat, ((0, 0), (0, 0), (0, HW_pad - HW)))

    inv_hw = 1.0 / float(HW)                     # true HW, not the padded width
    w1t = w1.T.astype(jnp.float32)               # (C, Ch)
    w2f = w2.astype(jnp.float32)                 # (C, Ch)

    budget = _vmem_budget_bytes()
    # Whole-slab path holds 2 input + 2 output slab buffers (+ tiny weights).
    slab_vmem = 4 * C * HW_pad * itemsize + 4 * C * Ch * 4

    if slab_vmem <= budget and not force_two_pass:
        out = pl.pallas_call(
            functools.partial(_whole_slab_kernel, inv_hw=inv_hw),
            out_shape=jax.ShapeDtypeStruct((B, C, HW_pad), x_dtype),
            grid=(B,),
            in_specs=[
                # whole per-batch slab (batch dim squeezed away in the kernel)
                pl.BlockSpec((None, C, HW_pad), lambda b: (b, 0, 0)),
                # tiny weights: full array, constant block index (not re-fetched)
                pl.BlockSpec((C, Ch), lambda b: (0, 0)),
                pl.BlockSpec((C, Ch), lambda b: (0, 0)),
            ],
            out_specs=pl.BlockSpec((None, C, HW_pad), lambda b: (b, 0, 0)),
            compiler_params=pltpu.CompilerParams(
                dimension_semantics=("parallel",),
                vmem_limit_bytes=int(budget),
            ),
            cost_estimate=pl.CostEstimate(
                flops=int(3 * B * C * HW + 4 * B * C * Ch),
                transcendentals=int(B * C),
                bytes_accessed=int(2 * B * C * HW_pad * itemsize + 2 * C * Ch * 4),
            ),
        )(x_flat, w1t, w2f)
    else:
        out = _channel_attention_two_pass(x_flat, w1t, w2f, inv_hw, budget, itemsize)

    if HW_pad != HW:
        out = out[:, :, :HW]
    return out.reshape(B, C, H, W)


def channel_attention_reference(x, w1, w2):
    """Pure-JAX reference mirroring the PyTorch forward (f32 compute)."""
    xf = x.astype(jnp.float32)
    avg = jnp.mean(xf, axis=(2, 3))                              # (B, C)
    h = jnp.maximum(avg @ w1.astype(jnp.float32).T, 0.0)         # (B, C//ratio)
    a = h @ w2.astype(jnp.float32).T                             # (B, C)
    scale = jax.nn.sigmoid(a)[:, :, None, None]                  # (B, C, 1, 1)
    return scale * xf


if __name__ == "__main__":
    key = jax.random.PRNGKey(0)
    k_x, k_w1, k_w2, k_x2 = jax.random.split(key, 4)

    B, C, ratio = 2, 64, 16
    Ch = C // ratio

    w1 = jax.random.normal(k_w1, (Ch, C), dtype=jnp.float32) * 0.1
    w2 = jax.random.normal(k_w2, (C, Ch), dtype=jnp.float32) * 0.1

    # 1) lane-aligned f32 input -> whole-slab path
    x = jax.random.normal(k_x, (B, C, 16, 16), dtype=jnp.float32)
    out = jax.block_until_ready(channel_attention(x, w1, w2))
    ref = channel_attention_reference(x, w1, w2)
    assert out.shape == x.shape
    assert jnp.allclose(out, ref, atol=1e-5, rtol=1e-5), "whole-slab mismatch"

    # 2) non-128-aligned spatial size (HW = 255) -> exercises the padding path
    x_odd = jax.random.normal(k_x2, (B, C, 15, 17), dtype=jnp.float32)
    out_odd = jax.block_until_ready(channel_attention(x_odd, w1, w2))
    ref_odd = channel_attention_reference(x_odd, w1, w2)
    assert jnp.allclose(out_odd, ref_odd, atol=1e-5, rtol=1e-5), "padded mismatch"

    # 3) bf16 HBM I/O (native dtype preserved end-to-end, f32 compute inside)
    x_bf16 = x.astype(jnp.bfloat16)
    out_bf16 = jax.block_until_ready(channel_attention(x_bf16, w1, w2))
    assert out_bf16.dtype == jnp.bfloat16
    ref_bf16 = channel_attention_reference(x_bf16, w1, w2)
    assert jnp.allclose(out_bf16.astype(jnp.float32), ref_bf16,
                        atol=5e-2, rtol=5e-2), "bf16 mismatch"

    # 4) forced two-pass (HW-tiled) path, used when the slab would exceed VMEM
    out_2p = jax.block_until_ready(channel_attention(x, w1, w2, force_two_pass=True))
    assert jnp.allclose(out_2p, ref, atol=1e-5, rtol=1e-5), "two-pass mismatch"

    print("KERNEL_OK")
</pallas_src>

<mosaic_0001>
module attributes {stable_mosaic.version = 11 : i64} {
  func.func @_whole_slab_kernel(%arg0: i32, %arg1: memref<1x64x256xf32, #tpu.memory_space<vmem>>, %arg2: memref<64x4xf32, #tpu.memory_space<vmem>>, %arg3: memref<64x4xf32, #tpu.memory_space<vmem>>, %arg4: memref<1x64x256xf32, #tpu.memory_space<vmem>>) attributes {dimension_semantics = [#tpu.dimension_semantics<parallel>], iteration_bounds = array<i64: 2>, scalar_prefetch = 0 : i64, scratch_operands = 0 : i64, tpu.core_type = #tpu.core_type<tc>, window_params = [{transform_indices = @transform_0, window_bounds = array<i64: 1, 64, 256>}, {pipeline_mode = #tpu.pipeline_mode<synchronous>, transform_indices = @transform_1, window_bounds = array<i64: 64, 4>}, {pipeline_mode = #tpu.pipeline_mode<synchronous>, transform_indices = @transform_2, window_bounds = array<i64: 64, 4>}, {transform_indices = @transform_3, window_bounds = array<i64: 1, 64, 256>}]} {
    %c0 = arith.constant 0 : index
    %c0_0 = arith.constant 0 : index
    %c0_1 = arith.constant 0 : index
    %0 = vector.load %arg1[%c0, %c0_0, %c0_1] : memref<1x64x256xf32, #tpu.memory_space<vmem>>, vector<1x64x256xf32>
    %1 = vector.shape_cast %0 : vector<1x64x256xf32> to vector<64x256xf32>
    %cst = arith.constant dense<0.000000e+00> : vector<64xf32>
    %2 = vector.multi_reduction <add>, %1, %cst [1] : vector<64x256xf32> to vector<64xf32>
    %3 = vector.shape_cast %2 : vector<64xf32> to vector<64x1xf32>
    %cst_2 = arith.constant 3.906250e-03 : f32
    %4 = vector.broadcast %cst_2 : f32 to vector<64x1xf32>
    %5 = arith.mulf %3, %4 : vector<64x1xf32>
    %c0_3 = arith.constant 0 : index
    %c0_4 = arith.constant 0 : index
    %6 = vector.load %arg2[%c0_3, %c0_4] : memref<64x4xf32, #tpu.memory_space<vmem>>, vector<64x4xf32>
    %7 = vector.broadcast %5 : vector<64x1xf32> to vector<64x4xf32>
    %8 = arith.mulf %6, %7 : vector<64x4xf32>
    %cst_5 = arith.constant dense<0.000000e+00> : vector<4xf32>
    %9 = vector.multi_reduction <add>, %8, %cst_5 [0] : vector<64x4xf32> to vector<4xf32>
    %10 = vector.shape_cast %9 : vector<4xf32> to vector<1x4xf32>
    %cst_6 = arith.constant 0.000000e+00 : f32
    %11 = vector.broadcast %cst_6 : f32 to vector<1x4xf32>
    %12 = arith.maximumf %10, %11 : vector<1x4xf32>
    %c0_7 = arith.constant 0 : index
    %c0_8 = arith.constant 0 : index
    %13 = vector.load %arg3[%c0_7, %c0_8] : memref<64x4xf32, #tpu.memory_space<vmem>>, vector<64x4xf32>
    %14 = vector.broadcast %12 : vector<1x4xf32> to vector<64x4xf32>
    %15 = arith.mulf %13, %14 : vector<64x4xf32>
    %cst_9 = arith.constant dense<0.000000e+00> : vector<64xf32>
    %16 = vector.multi_reduction <add>, %15, %cst_9 [1] : vector<64x4xf32> to vector<64xf32>
    %17 = vector.shape_cast %16 : vector<64xf32> to vector<64x1xf32>
    %18 = arith.negf %17 : vector<64x1xf32>
    %19 = math.exp %18 : vector<64x1xf32>
    %cst_10 = arith.constant 1.000000e+00 : f32
    %20 = vector.broadcast %cst_10 : f32 to vector<64x1xf32>
    %21 = arith.addf %20, %19 : vector<64x1xf32>
    %22 = arith.divf %20, %21 : vector<64x1xf32>
    %23 = vector.broadcast %22 : vector<64x1xf32> to vector<64x256xf32>
    %24 = arith.mulf %1, %23 : vector<64x256xf32>
    %c0_11 = arith.constant 0 : index
    %c0_12 = arith.constant 0 : index
    %c0_13 = arith.constant 0 : index
    %25 = vector.load %arg4[%c0_11, %c0_12, %c0_13] : memref<1x64x256xf32, #tpu.memory_space<vmem>>, vector<1x64x256xf32>
    %26 = vector.shape_cast %25 : vector<1x64x256xf32> to vector<64x256xf32>
    %27 = vector.shape_cast %24 : vector<64x256xf32> to vector<1x64x256xf32>
    tpu.vector_store %arg4[%c0_11, %c0_12, %c0_13], %27 {strides = array<i32>} : memref<1x64x256xf32, #tpu.memory_space<vmem>>, vector<1x64x256xf32>,
    return
  }
  func.func @transform_0(%arg0: i32) -> (i32, i32, i32) {
    %c0_i32 = arith.constant 0 : i32
    %c0_i32_0 = arith.constant 0 : i32
    %c0_i32_1 = arith.constant 0 : i32
    return %arg0, %c0_i32, %c0_i32_0 : i32, i32, i32
  }
  func.func @transform_1(%arg0: i32) -> (i32, i32) {
    %c0_i32 = arith.constant 0 : i32
    %c0_i32_0 = arith.constant 0 : i32
    %c0_i32_1 = arith.constant 0 : i32
    return %c0_i32, %c0_i32_0 : i32, i32
  }
  func.func @transform_2(%arg0: i32) -> (i32, i32) {
    %c0_i32 = arith.constant 0 : i32
    %c0_i32_0 = arith.constant 0 : i32
    %c0_i32_1 = arith.constant 0 : i32
    return %c0_i32, %c0_i32_0 : i32, i32
  }
  func.func @transform_3(%arg0: i32) -> (i32, i32, i32) {
    %c0_i32 = arith.constant 0 : i32
    %c0_i32_0 = arith.constant 0 : i32
    %c0_i32_1 = arith.constant 0 : i32
    return %arg0, %c0_i32, %c0_i32_0 : i32, i32, i32
  }
}

</mosaic_0001>

<llo_original>
// kernel: tpu_custom_call.1
$region0: #{tpu_custom_call.1}
  #allocation0 [shape = 'u32[]', space=smem, size = 0x4, offset = 0x4, fixed_abs, tag = 'smem constant byte address 0x4 - core index']
  #allocation1 [shape = 'u32[72,128]{1,0:T(1,128)}', space=vmem, size = 0x9000, scoped, tag = 'internal scratch']
  %s0 = inlined_call_operand.hbm [shape: f32[2,64,256], index: 0, kind: input, shape index: {}]
  %s1 = inlined_call_operand.vmem [shape: f32[64,4], index: 1, kind: input, shape index: {}]
  %s2 = inlined_call_operand.vmem [shape: f32[64,4], index: 2, kind: input, shape index: {}]
  %s3 = inlined_call_operand.hbm [shape: f32[2,64,256], index: 3, kind: output, shape index: {}]
  %s4 = sld [smem:[#allocation0]]
  $region49: #{tpu_custom_call.1} parent=0
    _
  %s6 = ssub.s32 1, %s4
  %s7 = scalar_select 0, %s6, %s4
  $region1: #{tpu_custom_call.1} parent=0
    #allocation2 [shape = 'u8[131072]{0}', space=vmem, size = 0x20000, scoped, tag = 'input window, operand 0']
    #allocation3 [shape = 's32[2]{0}', space=sflag, size = 0x8, scoped, tag = 'scoped memory for tpu_custom_call.1']
    #allocation4 [shape = 's32[2]{0}', space=sflag, size = 0x8, scoped, tag = 'scoped memory for tpu_custom_call.1']
    #allocation5 [shape = 'u8[131072]{0}', space=vmem, size = 0x20000, scoped, tag = 'output window, operand 0']
    %8 = vsyncpa [#allocation3], 0
    %s9 = scalar_lea.sflag [#allocation3], 1
    %10 = vsyncpa %s9, 0
    %11 = vsyncpa [#allocation4], 0
    %s12 = scalar_lea.sflag [#allocation4], 1
    %13 = vsyncpa %s12, 0
    loop: start=0, step=1, limit=4
    $region2: #{tpu_custom_call.1} parent=1 // loop_pre_header
      _
    $region3: #{tpu_custom_call.1} parent=1 // loop_header
      %s15 = sphi 0, %s19
      %p16 = scmp.ge.s32.totalorder %s15, 4
      %s25 = sphi 0, %s27
      %s28 = sphi 0, %s25
      %s29 = sphi 0, %s28
      %s45 = sphi 0, %s29
      %s49 = sphi 0, %s49
      %s51 = sphi 0, %s49
      %s52 = sphi 0, %s51
      %s66 = sphi 0, %s52
      %s70 = sphi 0, %s70
      %s72 = sphi 0, %s70
      %s73 = sphi 0, %s72
      %s87 = sphi 0, %s73
      %s93 = sphi 0, %s95
      %s96 = sphi 0, %s93
      %s97 = sphi 0, %s96
      %s113 = sphi 0, %s97
    $region4: #{tpu_custom_call.1} parent=1 // loop_header_branch
      %18 = sbr.rel (%p16) target = $region8
    $region5: #{tpu_custom_call.1} parent=1 // loop_body
      %s20 = ssub.s32 %s15, 1
      %s21 = ssub.s32 %s15, 2
      %s22 = sadd.s32 %s15, 1
      %s23 = ssub.s32 %s15, %s22
      %p24 = scmp.eq.s32.totalorder %s23, 0
      %s26 = sadd.s32 %s25, 1
      %s27 = scalar_select %p24, %s25, %s26
      %p30 = pneg %p24
      %p31 = scmp.eq.s32.totalorder %s15, 1
      %p32 = por %p30, %p31
      %p33 = scmp.ne.s32.totalorder %s25, %s28
      %p34 = scmp.eq.s32.totalorder %s15, 0
      %p35 = por %p33, %p34
      %p36 = scmp.ne.s32.totalorder %s25, %s28
      %p37 = scmp.eq.s32.totalorder %s20, 1
      %p38 = por %p36, %p37
      %p39 = scmp.ne.s32.totalorder %s28, %s29
      %p40 = scmp.eq.s32.totalorder %s20, 0
      %p41 = por %p39, %p40
      %p42 = scmp.ne.s32.totalorder %s28, %s29
      %p43 = scmp.eq.s32.totalorder %s21, 1
      %p44 = por %p42, %p43
      %p46 = scmp.ne.s32.totalorder %s29, %s45
      %p47 = scmp.eq.s32.totalorder %s21, 0
      %p48 = por %p46, %p47
      %s50 = sadd.s32 %s49, 1
      %p53 = scmp.eq.s32.totalorder %s15, 1
      %p54 = scmp.ne.s32.totalorder %s49, %s51
      %p55 = scmp.eq.s32.totalorder %s15, 0
      %p56 = por %p54, %p55
      %p57 = scmp.ne.s32.totalorder %s49, %s51
      %p58 = scmp.eq.s32.totalorder %s20, 1
      %p59 = por %p57, %p58
      %p60 = scmp.ne.s32.totalorder %s51, %s52
      %p61 = scmp.eq.s32.totalorder %s20, 0
      %p62 = por %p60, %p61
      %p63 = scmp.ne.s32.totalorder %s51, %s52
      %p64 = scmp.eq.s32.totalorder %s21, 1
      %p65 = por %p63, %p64
      %p67 = scmp.ne.s32.totalorder %s52, %s66
      %p68 = scmp.eq.s32.totalorder %s21, 0
      %p69 = por %p67, %p68
      %s71 = sadd.s32 %s70, 1
      %p74 = scmp.eq.s32.totalorder %s15, 1
      %p75 = scmp.ne.s32.totalorder %s70, %s72
      %p76 = scmp.eq.s32.totalorder %s15, 0
      %p77 = por %p75, %p76
      %p78 = scmp.ne.s32.totalorder %s70, %s72
      %p79 = scmp.eq.s32.totalorder %s20, 1
      %p80 = por %p78, %p79
      %p81 = scmp.ne.s32.totalorder %s72, %s73
      %p82 = scmp.eq.s32.totalorder %s20, 0
      %p83 = por %p81, %p82
      %p84 = scmp.ne.s32.totalorder %s72, %s73
      %p85 = scmp.eq.s32.totalorder %s21, 1
      %p86 = por %p84, %p85
      %p88 = scmp.ne.s32.totalorder %s73, %s87
      %p89 = scmp.eq.s32.totalorder %s21, 0
      %p90 = por %p88, %p89
      %s91 = ssub.s32 %s15, %s22
      %p92 = scmp.eq.s32.totalorder %s91, 0
      %s94 = sadd.s32 %s93, 1
      %s95 = scalar_select %p92, %s93, %s94
      %p98 = pneg %p92
      %p99 = scmp.eq.s32.totalorder %s15, 1
      %p100 = por %p98, %p99
      %p101 = scmp.ne.s32.totalorder %s93, %s96
      %p102 = scmp.eq.s32.totalorder %s15, 0
      %p103 = por %p101, %p102
      %p104 = scmp.ne.s32.totalorder %s93, %s96
      %p105 = scmp.eq.s32.totalorder %s20, 1
      %p106 = por %p104, %p105
      %p107 = scmp.ne.s32.totalorder %s96, %s97
      %p108 = scmp.eq.s32.totalorder %s20, 0
      %p109 = por %p107, %p108
      %p110 = scmp.ne.s32.totalorder %s96, %s97
      %p111 = scmp.eq.s32.totalorder %s21, 1
      %p112 = por %p110, %p111
      %p114 = scmp.ne.s32.totalorder %s97, %s113
      %p115 = scmp.eq.s32.totalorder %s21, 0
      %p116 = por %p114, %p115
      %p117 = scmp.le.s32.totalorder 1, %s15
      %p118 = scmp.lt.s32.totalorder %s15, 3
      %p119 = pnand %p117, %p118
      %p120 = pneg %p119
      // Predicated region
      $region9: #{tpu_custom_call.1} parent=5 // pred_check
        _
      $region10: #{tpu_custom_call.1} parent=5 // pred_check_branch
        %122 = sbr.rel (%p119) target = $region12
      $region11: #{tpu_custom_call.1} parent=5 // pred_region
        %s123 = ssub.s32 %s15, 1
        // Predicated region
        $region13: #{tpu_custom_call.1} parent=11 // pred_check
          %p124 = pneg %p62
        $region14: #{tpu_custom_call.1} parent=11 // pred_check_branch
          %126 = sbr.rel (%p124) target = $region16
        $region15: #{tpu_custom_call.1} parent=11 // pred_region
          _
        $region16: #{tpu_custom_call.1} parent=11 // pred_fallthru
          _
        // Predicated region
        $region17: #{tpu_custom_call.1} parent=11 // pred_check
          %p127 = pneg %p83
        $region18: #{tpu_custom_call.1} parent=11 // pred_check_branch
          %129 = sbr.rel (%p127) target = $region20
        $region19: #{tpu_custom_call.1} parent=11 // pred_region
          _
        $region20: #{tpu_custom_call.1} parent=11 // pred_fallthru
          _
      $region12: #{tpu_custom_call.1} parent=5 // pred_fallthru
        _
      %p130 = scmp.lt.s32.totalorder %s15, 2
      // Predicated region
      $region21: #{tpu_custom_call.1} parent=5 // pred_check
        %p131 = pneg %p130
      $region22: #{tpu_custom_call.1} parent=5 // pred_check_branch
        %133 = sbr.rel (%p131) target = $region24
      $region23: #{tpu_custom_call.1} parent=5 // pred_region
        // Predicated region
        $region25: #{tpu_custom_call.1} parent=23 // pred_check
          %p134 = pneg %p35
        $region26: #{tpu_custom_call.1} parent=23 // pred_check_branch
          %136 = sbr.rel (%p134) target = $region28
        $region27: #{tpu_custom_call.1} parent=23 // pred_region
          %s137 = sand.u32 %s25, 1
          %s138 = scalar_lea.sflag [#allocation3], %s137
          %s139 = sand.u32 %s25, 1
          %s140 = smul.addr %s139, 128
          %s141 = scalar_lea.vmem [#allocation2], %s140
          %143 = vsyncadd %s138, 0
          %s144 = smul.addr %s15, 16
          %s145 = smul.addr %s144, 8
          %s146 = scalar_lea.hbm %s0, %s145
          %s147 = sshll.u32 %s146, 4
          %s148 = int_to_ptr.hbm [resolvable:$true] %s147
          %s149 = sshll.u32 %s141, 4
          %s150 = int_to_ptr.vmem [resolvable:$true] %s149
          %155 = dma.hbm_to_vmem [thread:$0]  %s148, 2048, %s150, %s138, 256, 256, 16
        $region28: #{tpu_custom_call.1} parent=23 // pred_fallthru
          _
      $region24: #{tpu_custom_call.1} parent=5 // pred_fallthru
        _
      %p156 = scmp.le.s32.totalorder 1, %s15
      %p157 = scmp.lt.s32.totalorder %s15, 3
      %p158 = pnand %p156, %p157
      %p159 = pneg %p158
      // Predicated region
      $region29: #{tpu_custom_call.1} parent=5 // pred_check
        _
      $region30: #{tpu_custom_call.1} parent=5 // pred_check_branch
        %161 = sbr.rel (%p158) target = $region32
      $region31: #{tpu_custom_call.1} parent=5 // pred_region
        %s162 = ssub.s32 %s15, 1
        %s163 = sand.u32 %s28, 1
        %s164 = scalar_lea.sflag [#allocation3], %s163
        %s165 = sand.u32 %s28, 1
        %s166 = smul.addr %s165, 128
        %s167 = scalar_lea.vmem [#allocation2], %s166
        // Predicated region
        $region33: #{tpu_custom_call.1} parent=31 // pred_check
          %p168 = pneg %p41
        $region34: #{tpu_custom_call.1} parent=31 // pred_check_branch
          %170 = sbr.rel (%p168) target = $region36
        $region35: #{tpu_custom_call.1} parent=31 // pred_region
          %172 = dma.done %s164, 2048
        $region36: #{tpu_custom_call.1} parent=31 // pred_fallthru
          _
        %s173 = sand.u32 %s28, 1
        %s174 = scalar_lea.sflag [#allocation3], %s173
        %s175 = sand.u32 %s28, 1
        %s176 = smul.addr %s175, 128
        %s177 = scalar_lea.vmem [#allocation2], %s176
        %p178 = pneg %p41
        %p179 = pneg %p38
        %p180 = pneg %p62
        %p181 = pneg %p59
        %p182 = pneg %p83
        %p183 = pneg %p80
        %p184 = pneg %p109
        %p185 = pneg %p106
        %s186 = sand.u32 %s96, 1
        %s187 = scalar_lea.sflag [#allocation4], %s186
        %s188 = sand.u32 %s96, 1
        %s189 = smul.addr %s188, 128
        %s190 = scalar_lea.vmem [#allocation5], %s189
        %v191 = vld [vmem:[%s167] sm:$0xff]
        %v192 = vld [vmem:[%s167 + $0x8] sm:$0xff]
        %v193 = vld [vmem:[%s167 + $0x10] sm:$0xff]
        %v194 = vld [vmem:[%s167 + $0x18] sm:$0xff]
        %v195 = vld [vmem:[%s167 + $0x20] sm:$0xff]
        %v196 = vld [vmem:[%s167 + $0x28] sm:$0xff]
        %v197 = vld [vmem:[%s167 + $0x30] sm:$0xff]
        %v198 = vld [vmem:[%s167 + $0x38] sm:$0xff]
        %v199 = vld [vmem:[%s167 + $0x40] sm:$0xff]
        %v200 = vld [vmem:[%s167 + $0x48] sm:$0xff]
        %v201 = vld [vmem:[%s167 + $0x50] sm:$0xff]
        %v202 = vld [vmem:[%s167 + $0x58] sm:$0xff]
        %v203 = vld [vmem:[%s167 + $0x60] sm:$0xff]
        %v204 = vld [vmem:[%s167 + $0x68] sm:$0xff]
        %v205 = vld [vmem:[%s167 + $0x70] sm:$0xff]
        %v206 = vld [vmem:[%s167 + $0x78] sm:$0xff]
        %v207 = vadd.f32 %v191, %v192
        %208 = vadd.xlane.f32.xlu0 %v207
        %v209 = vpop.xlane.xlu0 %208
        %v210 = vadd.f32 %v193, %v194
        %211 = vadd.xlane.f32.xlu0 %v210
        %v212 = vpop.xlane.xlu0 %211
        %v213 = vadd.f32 %v195, %v196
        %214 = vadd.xlane.f32.xlu0 %v213
        %v215 = vpop.xlane.xlu0 %214
        %v216 = vadd.f32 %v197, %v198
        %217 = vadd.xlane.f32.xlu0 %v216
        %v218 = vpop.xlane.xlu0 %217
        %v219 = vadd.f32 %v199, %v200
        %220 = vadd.xlane.f32.xlu0 %v219
        %v221 = vpop.xlane.xlu0 %220
        %v222 = vadd.f32 %v201, %v202
        %223 = vadd.xlane.f32.xlu0 %v222
        %v224 = vpop.xlane.xlu0 %223
        %v225 = vadd.f32 %v203, %v204
        %226 = vadd.xlane.f32.xlu0 %v225
        %v227 = vpop.xlane.xlu0 %226
        %v228 = vadd.f32 %v205, %v206
        %229 = vadd.xlane.f32.xlu0 %v228
        %v230 = vpop.xlane.xlu0 %229
        %v231 = vmul.f32 %v209, 0.00390625
        %v232 = vmul.f32 %v212, 0.00390625
        %v233 = vmul.f32 %v215, 0.00390625
        %v234 = vmul.f32 %v218, 0.00390625
        %v235 = vmul.f32 %v221, 0.00390625
        %v236 = vmul.f32 %v224, 0.00390625
        %v237 = vmul.f32 %v227, 0.00390625
        %v238 = vmul.f32 %v230, 0.00390625
        %v239 = vld [vmem:[%s1] sm:$0xff]
        %v240 = vld [vmem:[%s1 + $0x8] sm:$0xff]
        %v241 = vld [vmem:[%s1 + $0x10] sm:$0xff]
        %v242 = vld [vmem:[%s1 + $0x18] sm:$0xff]
        %v243 = vld [vmem:[%s1 + $0x20] sm:$0xff]
        %v244 = vld [vmem:[%s1 + $0x28] sm:$0xff]
        %v245 = vld [vmem:[%s1 + $0x30] sm:$0xff]
        %v246 = vld [vmem:[%s1 + $0x38] sm:$0xff]
        %v247 = vmul.f32 %v239, %v231
        %v248 = vmul.f32 %v240, %v232
        %v249 = vmul.f32 %v241, %v233
        %v250 = vmul.f32 %v242, %v234
        %v251 = vmul.f32 %v243, %v235
        %v252 = vmul.f32 %v244, %v236
        %v253 = vmul.f32 %v245, %v237
        %v254 = vmul.f32 %v246, %v238
        %vm255 = vcmask 31744
        %v256 = vsel %vm255, %v247, 0.0
        %v257 = vsel %vm255, %v248, 0.0
        %v258 = vadd.f32 %v256, %v257
        %v259 = vsel %vm255, %v249, 0.0
        %v260 = vadd.f32 %v258, %v259
        %v261 = vsel %vm255, %v250, 0.0
        %v262 = vadd.f32 %v260, %v261
        %v263 = vsel %vm255, %v251, 0.0
        %v264 = vadd.f32 %v262, %v263
        %v265 = vsel %vm255, %v252, 0.0
        %v266 = vadd.f32 %v264, %v265
        %v267 = vsel %vm255, %v253, 0.0
        %v268 = vadd.f32 %v266, %v267
        %v269 = vsel %vm255, %v254, 0.0
        %v270 = vadd.f32 %v268, %v269
        %v271 = vrot.slane %v270, 4
        %v272 = vadd.f32 %v270, %v271
        %v273 = vrot.slane %v272, 2
        %v274 = vadd.f32 %v272, %v273
        %v275 = vrot.slane %v274, 1
        %v276 = vadd.f32 %v274, %v275
        %v277 = vmax.f32 %v276, 0.0
        %v278 = vld [vmem:[%s2] sm:$0xff]
        %v279 = vld [vmem:[%s2 + $0x8] sm:$0xff]
        %v280 = vld [vmem:[%s2 + $0x10] sm:$0xff]
        %v281 = vld [vmem:[%s2 + $0x18] sm:$0xff]
        %v282 = vld [vmem:[%s2 + $0x20] sm:$0xff]
        %v283 = vld [vmem:[%s2 + $0x28] sm:$0xff]
        %v284 = vld [vmem:[%s2 + $0x30] sm:$0xff]
        %v285 = vld [vmem:[%s2 + $0x38] sm:$0xff]
        %v286 = vmul.f32 %v278, %v277
        %v287 = vmul.f32 %v279, %v277
        %v288 = vmul.f32 %v280, %v277
        %v289 = vmul.f32 %v281, %v277
        %v290 = vmul.f32 %v282, %v277
        %v291 = vmul.f32 %v283, %v277
        %v292 = vmul.f32 %v284, %v277
        %v293 = vmul.f32 %v285, %v277
        %v294 = vsel %vm255, %v286, 0.0
        %295 = vadd.xlane.f32.xlu0 %v294
        %v296 = vpop.xlane.xlu0 %295
        %v297 = vsel %vm255, %v287, 0.0
        %298 = vadd.xlane.f32.xlu0 %v297
        %v299 = vpop.xlane.xlu0 %298
        %v300 = vsel %vm255, %v288, 0.0
        %301 = vadd.xlane.f32.xlu0 %v300
        %v302 = vpop.xlane.xlu0 %301
        %v303 = vsel %vm255, %v289, 0.0
        %304 = vadd.xlane.f32.xlu0 %v303
        %v305 = vpop.xlane.xlu0 %304
        %v306 = vsel %vm255, %v290, 0.0
        %307 = vadd.xlane.f32.xlu0 %v306
        %v308 = vpop.xlane.xlu0 %307
        %v309 = vsel %vm255, %v291, 0.0
        %310 = vadd.xlane.f32.xlu0 %v309
        %v311 = vpop.xlane.xlu0 %310
        %v312 = vsel %vm255, %v292, 0.0
        %313 = vadd.xlane.f32.xlu0 %v312
        %v314 = vpop.xlane.xlu0 %313
        %v315 = vsel %vm255, %v293, 0.0
        %316 = vadd.xlane.f32.xlu0 %v315
        %v317 = vpop.xlane.xlu0 %316
        %v318 = vxor.u32 %v296, 2147483648
        %v319 = vxor.u32 %v299, 2147483648
        %v320 = vxor.u32 %v302, 2147483648
        %v321 = vxor.u32 %v305, 2147483648
        %v322 = vxor.u32 %v308, 2147483648
        %v323 = vxor.u32 %v311, 2147483648
        %v324 = vxor.u32 %v314, 2147483648
        %v325 = vxor.u32 %v317, 2147483648
        %v326 = vmul.f32 %v318, 1.442695
        %v327 = vpow.pop %v326
        %v328 = vmul.f32 %v319, 1.442695
        %v329 = vpow.pop %v328
        %v330 = vmul.f32 %v320, 1.442695
        %v331 = vpow.pop %v330
        %v332 = vmul.f32 %v321, 1.442695
        %v333 = vpow.pop %v332
        %v334 = vmul.f32 %v322, 1.442695
        %v335 = vpow.pop %v334
        %v336 = vmul.f32 %v323, 1.442695
        %v337 = vpow.pop %v336
        %v338 = vmul.f32 %v324, 1.442695
        %v339 = vpow.pop %v338
        %v340 = vmul.f32 %v325, 1.442695
        %v341 = vpow.pop %v340
        %v342 = vadd.f32 %v327, 1.0
        %v343 = vadd.f32 %v329, 1.0
        %v344 = vadd.f32 %v331, 1.0
        %v345 = vadd.f32 %v333, 1.0
        %v346 = vadd.f32 %v335, 1.0
        %v347 = vadd.f32 %v337, 1.0
        %v348 = vadd.f32 %v339, 1.0
        %v349 = vadd.f32 %v341, 1.0
        %v350 = vrcp.pop %v342
        %v351 = vmul.f32 %v342, %v350
        %v352 = vsub.f32 1.0, %v351
        %v353 = vmul.f32 %v350, %v352
        %v354 = vadd.f32 %v350, %v353
        %vm355 = vweird.f32 %v342
        %vm356 = vweird.f32 %v350
        %vm357 = vmor %vm355, %vm356
        %v358 = vsel %vm357, %v350, %v354
        %v359 = vand.u32 2147483647, %v342
        %vm360 = vcmp.eq.f32.partialorder %v359, 8.507059e+37
        %v361 = vand.u32 %v342, 2147483648
        %v362 = vor.u32 1.1754944e-38, %v361
        %v363 = vsel %vm360, %v362, %v358
        %v364 = vmul.f32 1.0, %v363
        %v365 = vrcp.pop %v343
        %v366 = vmul.f32 %v343, %v365
        %v367 = vsub.f32 1.0, %v366
        %v368 = vmul.f32 %v365, %v367
        %v369 = vadd.f32 %v365, %v368
        %vm370 = vweird.f32 %v343
        %vm371 = vweird.f32 %v365
        %vm372 = vmor %vm370, %vm371
        %v373 = vsel %vm372, %v365, %v369
        %v374 = vand.u32 2147483647, %v343
        %vm375 = vcmp.eq.f32.partialorder %v374, 8.507059e+37
        %v376 = vand.u32 %v343, 2147483648
        %v377 = vor.u32 1.1754944e-38, %v376
        %v378 = vsel %vm375, %v377, %v373
        %v379 = vmul.f32 1.0, %v378
        %v380 = vrcp.pop %v344
        %v381 = vmul.f32 %v344, %v380
        %v382 = vsub.f32 1.0, %v381
        %v383 = vmul.f32 %v380, %v382
        %v384 = vadd.f32 %v380, %v383
        %vm385 = vweird.f32 %v344
        %vm386 = vweird.f32 %v380
        %vm387 = vmor %vm385, %vm386
        %v388 = vsel %vm387, %v380, %v384
        %v389 = vand.u32 2147483647, %v344
        %vm390 = vcmp.eq.f32.partialorder %v389, 8.507059e+37
        %v391 = vand.u32 %v344, 2147483648
        %v392 = vor.u32 1.1754944e-38, %v391
        %v393 = vsel %vm390, %v392, %v388
        %v394 = vmul.f32 1.0, %v393
        %v395 = vrcp.pop %v345
        %v396 = vmul.f32 %v345, %v395
        %v397 = vsub.f32 1.0, %v396
        %v398 = vmul.f32 %v395, %v397
        %v399 = vadd.f32 %v395, %v398
        %vm400 = vweird.f32 %v345
        %vm401 = vweird.f32 %v395
        %vm402 = vmor %vm400, %vm401
        %v403 = vsel %vm402, %v395, %v399
        %v404 = vand.u32 2147483647, %v345
        %vm405 = vcmp.eq.f32.partialorder %v404, 8.507059e+37
        %v406 = vand.u32 %v345, 2147483648
        %v407 = vor.u32 1.1754944e-38, %v406
        %v408 = vsel %vm405, %v407, %v403
        %v409 = vmul.f32 1.0, %v408
        %v410 = vrcp.pop %v346
        %v411 = vmul.f32 %v346, %v410
        %v412 = vsub.f32 1.0, %v411
        %v413 = vmul.f32 %v410, %v412
        %v414 = vadd.f32 %v410, %v413
        %vm415 = vweird.f32 %v346
        %vm416 = vweird.f32 %v410
        %vm417 = vmor %vm415, %vm416
        %v418 = vsel %vm417, %v410, %v414
        %v419 = vand.u32 2147483647, %v346
        %vm420 = vcmp.eq.f32.partialorder %v419, 8.507059e+37
        %v421 = vand.u32 %v346, 2147483648
        %v422 = vor.u32 1.1754944e-38, %v421
        %v423 = vsel %vm420, %v422, %v418
        %v424 = vmul.f32 1.0, %v423
        %v425 = vrcp.pop %v347
        %v426 = vmul.f32 %v347, %v425
        %v427 = vsub.f32 1.0, %v426
        %v428 = vmul.f32 %v425, %v427
        %v429 = vadd.f32 %v425, %v428
        %vm430 = vweird.f32 %v347
        %vm431 = vweird.f32 %v425
        %vm432 = vmor %vm430, %vm431
        %v433 = vsel %vm432, %v425, %v429
        %v434 = vand.u32 2147483647, %v347
        %vm435 = vcmp.eq.f32.partialorder %v434, 8.507059e+37
        %v436 = vand.u32 %v347, 2147483648
        %v437 = vor.u32 1.1754944e-38, %v436
        %v438 = vsel %vm435, %v437, %v433
        %v439 = vmul.f32 1.0, %v438
        %v440 = vrcp.pop %v348
        %v441 = vmul.f32 %v348, %v440
        %v442 = vsub.f32 1.0, %v441
        %v443 = vmul.f32 %v440, %v442
        %v444 = vadd.f32 %v440, %v443
        %vm445 = vweird.f32 %v348
        %vm446 = vweird.f32 %v440
        %vm447 = vmor %vm445, %vm446
        %v448 = vsel %vm447, %v440, %v444
        %v449 = vand.u32 2147483647, %v348
        %vm450 = vcmp.eq.f32.partialorder %v449, 8.507059e+37
        %v451 = vand.u32 %v348, 2147483648
        %v452 = vor.u32 1.1754944e-38, %v451
        %v453 = vsel %vm450, %v452, %v448
        %v454 = vmul.f32 1.0, %v453
        %v455 = vrcp.pop %v349
        %v456 = vmul.f32 %v349, %v455
        %v457 = vsub.f32 1.0, %v456
        %v458 = vmul.f32 %v455, %v457
        %v459 = vadd.f32 %v455, %v458
        %vm460 = vweird.f32 %v349
        %vm461 = vweird.f32 %v455
        %vm462 = vmor %vm460, %vm461
        %v463 = vsel %vm462, %v455, %v459
        %v464 = vand.u32 2147483647, %v349
        %vm465 = vcmp.eq.f32.partialorder %v464, 8.507059e+37
        %v466 = vand.u32 %v349, 2147483648
        %v467 = vor.u32 1.1754944e-38, %v466
        %v468 = vsel %vm465, %v467, %v463
        %v469 = vmul.f32 1.0, %v468
        %v470 = vmul.f32 %v191, %v364
        %v471 = vmul.f32 %v192, %v364
        %v472 = vmul.f32 %v193, %v379
        %v473 = vmul.f32 %v194, %v379
        %v474 = vmul.f32 %v195, %v394
        %v475 = vmul.f32 %v196, %v394
        %v476 = vmul.f32 %v197, %v409
        %v477 = vmul.f32 %v198, %v409
        %v478 = vmul.f32 %v199, %v424
        %v479 = vmul.f32 %v200, %v424
        %v480 = vmul.f32 %v201, %v439
        %v481 = vmul.f32 %v202, %v439
        %v482 = vmul.f32 %v203, %v454
        %v483 = vmul.f32 %v204, %v454
        %v484 = vmul.f32 %v205, %v469
        %v485 = vmul.f32 %v206, %v469
        %486 = vst [vmem:[%s190] sm:$0xff] %v470
        %487 = vst [vmem:[%s190 + $0x8] sm:$0xff] %v471
        %488 = vst [vmem:[%s190 + $0x10] sm:$0xff] %v472
        %489 = vst [vmem:[%s190 + $0x18] sm:$0xff] %v473
        %490 = vst [vmem:[%s190 + $0x20] sm:$0xff] %v474
        %491 = vst [vmem:[%s190 + $0x28] sm:$0xff] %v475
        %492 = vst [vmem:[%s190 + $0x30] sm:$0xff] %v476
        %493 = vst [vmem:[%s190 + $0x38] sm:$0xff] %v477
        %494 = vst [vmem:[%s190 + $0x40] sm:$0xff] %v478
        %495 = vst [vmem:[%s190 + $0x48] sm:$0xff] %v479
        %496 = vst [vmem:[%s190 + $0x50] sm:$0xff] %v480
        %497 = vst [vmem:[%s190 + $0x58] sm:$0xff] %v481
        %498 = vst [vmem:[%s190 + $0x60] sm:$0xff] %v482
        %499 = vst [vmem:[%s190 + $0x68] sm:$0xff] %v483
        %500 = vst [vmem:[%s190 + $0x70] sm:$0xff] %v484
        %501 = vst [vmem:[%s190 + $0x78] sm:$0xff] %v485
        %s502 = sand.u32 %s96, 1
        %s503 = scalar_lea.sflag [#allocation4], %s502
        %s504 = sand.u32 %s96, 1
        %s505 = smul.addr %s504, 128
        %s506 = scalar_lea.vmem [#allocation5], %s505
        // Predicated region
        $region37: #{tpu_custom_call.1} parent=31 // pred_check
          %p507 = pneg %p106
        $region38: #{tpu_custom_call.1} parent=31 // pred_check_branch
          %509 = sbr.rel (%p507) target = $region40
        $region39: #{tpu_custom_call.1} parent=31 // pred_region
          %511 = vsyncadd %s503, 0
          %s512 = smul.addr %s20, 16
          %s513 = smul.addr %s512, 8
          %s514 = scalar_lea.hbm %s3, %s513
          %s515 = sshll.u32 %s506, 4
          %s516 = int_to_ptr.vmem [resolvable:$true] %s515
          %s517 = sshll.u32 %s514, 4
          %s518 = int_to_ptr.hbm [resolvable:$true] %s517
          %523 = dma.vmem_to_hbm [thread:$0]  %s516, 2048, %s518, %s503, 256, 256, 16
        $region40: #{tpu_custom_call.1} parent=31 // pred_fallthru
          _
      $region32: #{tpu_custom_call.1} parent=5 // pred_fallthru
        _
      %p524 = scmp.le.s32.totalorder 2, %s15
      // Predicated region
      $region41: #{tpu_custom_call.1} parent=5 // pred_check
        %p525 = pneg %p524
      $region42: #{tpu_custom_call.1} parent=5 // pred_check_branch
        %527 = sbr.rel (%p525) target = $region44
      $region43: #{tpu_custom_call.1} parent=5 // pred_region
        %s528 = ssub.s32 %s15, 2
        // Predicated region
        $region45: #{tpu_custom_call.1} parent=43 // pred_check
          %p529 = pneg %p112
        $region46: #{tpu_custom_call.1} parent=43 // pred_check_branch
          %531 = sbr.rel (%p529) target = $region48
        $region47: #{tpu_custom_call.1} parent=43 // pred_region
          %s532 = sand.u32 %s97, 1
          %s533 = scalar_lea.sflag [#allocation4], %s532
          %s534 = sand.u32 %s97, 1
          %s535 = smul.addr %s534, 128
          %s536 = scalar_lea.vmem [#allocation5], %s535
          %538 = dma.done %s533, 2048
        $region48: #{tpu_custom_call.1} parent=43 // pred_fallthru
          _
      $region44: #{tpu_custom_call.1} parent=5 // pred_fallthru
        _
    $region6: #{tpu_custom_call.1} parent=1 // loop_footer
      %s19 = sadd.s32 1, %s15
    $region7: #{tpu_custom_call.1} parent=1 // loop_footer_branch
      %14 = sbr.rel target = $region3
    $region8: #{tpu_custom_call.1} parent=1 // loop_exit
      _
    %539 = vsyncpa [#allocation3], 1
    %s540 = scalar_lea.sflag [#allocation3], 1
    %541 = vsyncpa %s540, 1
    %542 = vsyncpa [#allocation4], 1
    %s543 = scalar_lea.sflag [#allocation4], 1
    %544 = vsyncpa %s543, 1

</llo_original>
